<compile_context>
chip_gen: v7x
topology: tpu7x:2x2x1
jax: 0.10.0
libtpu: 0.0.40
codegen_flags: <defaults>
</compile_context>

<pallas_src>
import jax
import jax.numpy as jnp
from jax.experimental import pallas as pl
from jax.experimental.pallas import tpu as pltpu


def _copy_kernel(x_ref, o_ref):
    # Pure elementwise copy of the current VMEM tile.
    o_ref[...] = x_ref[...]


_TARGET_BLOCK_BYTES = 2 * 1024 * 1024      # 2 MiB/block -> 8 MiB double-buffered
_MIN_BLOCK_BYTES = 512 * 1024              # never split below this (per-step overhead)
_MIN_GRID_STEPS = 4                        # 2 pipelined steps per v7x TensorCore
_SMALL_FULL_BLOCK_BYTES = 2 * 1024 * 1024  # single full-array-block threshold
_LANE_CANDIDATES = (1024, 512, 256, 128)
_AWKWARD_1D_TILE = 64 * 1024               # elements; multiple of 128


def _copy_call(x, block_shape, grid):
    """Tiled HBM->HBM copy of `x` via Pallas (1-D or 2-D view)."""
    itemsize = jnp.dtype(x.dtype).itemsize
    nd = len(block_shape)
    index_map = lambda i: (i,) + (0,) * (nd - 1)
    return pl.pallas_call(
        _copy_kernel,
        out_shape=jax.ShapeDtypeStruct(x.shape, x.dtype),
        grid=grid,
        in_specs=[pl.BlockSpec(block_shape, index_map)],
        out_specs=pl.BlockSpec(block_shape, index_map),
        cost_estimate=pl.CostEstimate(
            flops=0,
            transcendentals=0,
            bytes_accessed=2 * x.size * itemsize,
        ),
        compiler_params=pltpu.CompilerParams(
            dimension_semantics=("parallel",),
        ),
    )(x)


def _pick_lane(total, sublane):
    """Lane-dense width (multiple of 128) dividing the element count."""
    for cand in _LANE_CANDIDATES:
        if total % cand == 0 and total // cand >= sublane:
            return cand
    for cand in _LANE_CANDIDATES:
        if total % cand == 0:
            return cand
    return None


def _pick_tile_rows(rows, lane, itemsize, sublane):
    row_bytes = lane * itemsize
    # ~2 MiB per block, a multiple of the sublane quantum.
    rpb = max(1, _TARGET_BLOCK_BYTES // row_bytes)
    rpb = max(sublane, (rpb // sublane) * sublane)
    tile_rows = min(rows, rpb)
    # Keep v7x's two TensorCores pipelined: force >= _MIN_GRID_STEPS steps,
    # but only when every step still moves >= _MIN_BLOCK_BYTES so single-TC
    # v5e/v6e do not pay pure per-step overhead on small tensors.
    if (pl.cdiv(rows, tile_rows) < _MIN_GRID_STEPS
            and rows * row_bytes >= _MIN_GRID_STEPS * _MIN_BLOCK_BYTES):
        want = -(-rows // _MIN_GRID_STEPS)              # ceil(rows / steps)
        tile_rows = max(sublane, -(-want // sublane) * sublane)
        tile_rows = min(tile_rows, rows)
    return tile_rows


def _identity_copy(x):
    """Materialize a fresh copy of x with a Pallas kernel (HBM-BW bound)."""
    orig_shape = x.shape
    total = int(x.size)
    if total == 0:
        return x

    itemsize = jnp.dtype(x.dtype).itemsize
    sublane = max(8, 32 // max(1, itemsize))   # 8 f32 / 16 bf16 / 32 int8
    total_bytes = total * itemsize

    flat = x.reshape(-1)   # row-major flatten: layout plumbing only, no traffic

    lane = _pick_lane(total, sublane)
    if lane is not None:
        rows = total // lane
        tile_rows = _pick_tile_rows(rows, lane, itemsize, sublane)
        out = _copy_call(flat.reshape(rows, lane),
                         (tile_rows, lane),
                         (pl.cdiv(rows, tile_rows),))
        return out.reshape(orig_shape)

    # Element count not a multiple of 128.
    if total_bytes <= _SMALL_FULL_BLOCK_BYTES:
        # One full-array block is legal for any shape (block dims == full
        # array dims) and fits comfortably in VMEM.
        out = _copy_call(flat.reshape(1, total), (1, total), (1,))
        return out.reshape(orig_shape)

    # Large + awkward size: masked 1-D tiled copy.  128-multiple chunks keep
    # stores lane-aligned; Pallas masks the partial last block.  No pad /
    # slice / concat extra HBM passes (the old fallback cost ~2x traffic).
    tile = min(_AWKWARD_1D_TILE, total)
    out = _copy_call(flat, (tile,), (pl.cdiv(total, tile),))
    return out.reshape(orig_shape)


def identity(x, *, force_copy: bool = False):
    """Identity forward pass (torch.nn.Identity equivalent).

    Default path returns `x` unchanged — exactly the module's semantics and
    zero HBM traffic.  Set force_copy=True when a freshly materialized,
    non-aliasing output buffer is required; that path runs the Pallas copy
    kernel tuned for the HBM roofline on v5e/v6e/v7x.
    """
    if not force_copy:
        return x
    return _identity_copy(x)


if __name__ == "__main__":
    key = jax.random.PRNGKey(0)
    # Small NCHW input consistent with typical usage of this placeholder op.
    x = jax.random.normal(key, (2, 4, 16, 16), dtype=jnp.float32)

    # Production path: true identity, zero HBM traffic.
    y = identity(x)
    jax.block_until_ready(y)
    assert y.shape == x.shape and y.dtype == x.dtype
    assert bool(jnp.all(y == x))

    # Explicit-copy path: exercises the Pallas copy kernel on TPU
    # (lane-dense 2-D tiling).
    y_copy = identity(x, force_copy=True)
    jax.block_until_ready(y_copy)
    assert y_copy.shape == x.shape and y_copy.dtype == x.dtype
    assert bool(jnp.all(y_copy == x))

    # Awkward (non-128-multiple) element count: single full-array block path.
    x_odd = jax.random.normal(jax.random.PRNGKey(1), (3, 5, 7), dtype=jnp.float32)
    y_odd = identity(x_odd, force_copy=True)
    jax.block_until_ready(y_odd)
    assert bool(jnp.all(y_odd == x_odd))

    print("KERNEL_OK")
</pallas_src>

<mosaic_0001>
module attributes {stable_mosaic.version = 11 : i64} {
  func.func @_copy_kernel(%arg0: i32, %arg1: memref<8x256xf32, #tpu.memory_space<vmem>>, %arg2: memref<8x256xf32, #tpu.memory_space<vmem>>) attributes {dimension_semantics = [#tpu.dimension_semantics<parallel>], iteration_bounds = array<i64: 1>, scalar_prefetch = 0 : i64, scratch_operands = 0 : i64, tpu.core_type = #tpu.core_type<tc>, window_params = [{transform_indices = @transform_0, window_bounds = array<i64: 8, 256>}, {transform_indices = @transform_1, window_bounds = array<i64: 8, 256>}]} {
    %c0 = arith.constant 0 : index
    %c0_0 = arith.constant 0 : index
    %0 = vector.load %arg1[%c0, %c0_0] : memref<8x256xf32, #tpu.memory_space<vmem>>, vector<8x256xf32>
    %c0_1 = arith.constant 0 : index
    %c0_2 = arith.constant 0 : index
    %1 = vector.load %arg2[%c0_1, %c0_2] : memref<8x256xf32, #tpu.memory_space<vmem>>, vector<8x256xf32>
    tpu.vector_store %arg2[%c0_1, %c0_2], %0 {strides = array<i32>} : memref<8x256xf32, #tpu.memory_space<vmem>>, vector<8x256xf32>,
    return
  }
  func.func @transform_0(%arg0: i32) -> (i32, i32) {
    %c0_i32 = arith.constant 0 : i32
    %c0_i32_0 = arith.constant 0 : i32
    return %arg0, %c0_i32 : i32, i32
  }
  func.func @transform_1(%arg0: i32) -> (i32, i32) {
    %c0_i32 = arith.constant 0 : i32
    %c0_i32_0 = arith.constant 0 : i32
    return %arg0, %c0_i32 : i32, i32
  }
}

</mosaic_0001>

<llo_original>
// kernel: tpu_custom_call.1
$region0: #{tpu_custom_call.1}
  #allocation0 [shape = 'u32[]', space=smem, size = 0x4, offset = 0x4, fixed_abs, tag = 'smem constant byte address 0x4 - core index']
  #allocation1 [shape = 'u32[144,128]{1,0:T(1,128)}', space=vmem, size = 0x12000, scoped, tag = 'internal scratch']
  %s0 = inlined_call_operand.hbm [shape: f32[8,256], index: 0, kind: input, shape index: {}]
  %s1 = inlined_call_operand.hbm [shape: f32[8,256], index: 1, kind: output, shape index: {}]
  %s2 = sld [smem:[#allocation0]]
  $region18: #{tpu_custom_call.1} parent=0
    _
  %s4 = ssub.s32 1, %s2
  %s5 = scalar_select 0, %s4, %s2
  $region1: #{tpu_custom_call.1} parent=0
    #allocation2 [shape = 'u8[8192]{0}', space=vmem, size = 0x2000, scoped, tag = 'input window, operand 0, single buffered']
    #allocation3 [shape = 's32[1]{0}', space=sflag, size = 0x4, scoped, tag = 'scoped memory for tpu_custom_call.1']
    #allocation4 [shape = 's32[1]{0}', space=sflag, size = 0x4, scoped, tag = 'scoped memory for tpu_custom_call.1']
    #allocation5 [shape = 'u8[8192]{0}', space=vmem, size = 0x2000, scoped, tag = 'output window, operand 0, single buffered']
    %6 = vsyncpa [#allocation3], 0
    %7 = vsyncpa [#allocation4], 0
    // Predicated region
    $region2: #{tpu_custom_call.1} parent=1 // pred_check
      _
    $region3: #{tpu_custom_call.1} parent=1 // pred_check_branch
      %9 = sbr.rel (0) target = $region5
    $region4: #{tpu_custom_call.1} parent=1 // pred_region
      %s11 = ssub.s32 256, 256
      %12 = vsyncadd [#allocation3], %s11
      %s14 = sshll.u32 [#allocation2], 4
      %s15 = int_to_ptr.vmem [resolvable:$true] %s14
      %17 = dma.hbm_to_vmem [thread:$0]  %s0, 256, %s15, [#allocation3]
    $region5: #{tpu_custom_call.1} parent=1 // pred_fallthru
      _
    // Predicated region
    $region6: #{tpu_custom_call.1} parent=1 // pred_check
      _
    $region7: #{tpu_custom_call.1} parent=1 // pred_check_branch
      %19 = sbr.rel (0) target = $region9
    $region8: #{tpu_custom_call.1} parent=1 // pred_region
      %20 = dma.done [#allocation3], 256
    $region9: #{tpu_custom_call.1} parent=1 // pred_fallthru
      _
    %v21 = vld [vmem:[#allocation2] sm:$0xff]
    %v22 = vld [vmem:[#allocation2 + $0x8] sm:$0xff]
    %23 = vst [vmem:[#allocation5] sm:$0xff] %v21
    %24 = vst [vmem:[#allocation5 + $0x8] sm:$0xff] %v22
    // Predicated region
    $region10: #{tpu_custom_call.1} parent=1 // pred_check
      _
    $region11: #{tpu_custom_call.1} parent=1 // pred_check_branch
      %26 = sbr.rel (0) target = $region13
    $region12: #{tpu_custom_call.1} parent=1 // pred_region
      %s28 = ssub.s32 256, 256
      %29 = vsyncadd [#allocation4], %s28
      %s31 = sshll.u32 [#allocation5], 4
      %s32 = int_to_ptr.vmem [resolvable:$true] %s31
      %34 = dma.vmem_to_hbm [thread:$0]  %s32, 256, %s1, [#allocation4]
    $region13: #{tpu_custom_call.1} parent=1 // pred_fallthru
      _
    // Predicated region
    $region14: #{tpu_custom_call.1} parent=1 // pred_check
      _
    $region15: #{tpu_custom_call.1} parent=1 // pred_check_branch
      %36 = sbr.rel (0) target = $region17
    $region16: #{tpu_custom_call.1} parent=1 // pred_region
      %37 = dma.done [#allocation4], 256
    $region17: #{tpu_custom_call.1} parent=1 // pred_fallthru
      _
    %38 = vsyncpa [#allocation3], 1
    %39 = vsyncpa [#allocation4], 1

</llo_original>
